<compile_context>
chip_gen: v6e
topology: v6e:2x2x1
jax: 0.10.0
libtpu: 0.0.40
codegen_flags: <defaults>
</compile_context>

<pallas_src>
import jax
import jax.numpy as jnp
from jax.experimental import pallas as pl
from jax.experimental.pallas import tpu as pltpu


def _finish(xf, s, o_ref):
    base = 2.0 + 0.0001 * s                         # >= 2, always positive
    # base ** -0.75 == rsqrt(base * sqrt(base)): 2 EUP transcendentals, no divide.
    inv = jax.lax.rsqrt(base * jnp.sqrt(base))
    o_ref[0] = (xf * inv).astype(o_ref.dtype)


def lrn_band_kernel(band_ref, x_ref, o_ref):
    # band_ref: (C, C) f32, fetched once (constant block index).
    # x_ref / o_ref: (1, C, T) block — full channel dim on sublanes, lane-dense tile.
    xf = x_ref[0].astype(jnp.float32)               # (C, T)
    x_sq = xf * xf
    # 5-wide cross-channel window sum as a banded matmul on the otherwise-idle MXU.
    s = jnp.dot(band_ref[...], x_sq, preferred_element_type=jnp.float32)
    _finish(xf, s, o_ref)


def lrn_roll_kernel(x_ref, o_ref):
    # Large-C path: window sum via sublane rolls + edge masks (no O(C^2) matmul).
    xf = x_ref[0].astype(jnp.float32)               # (C, T)
    x_sq = xf * xf
    C = x_sq.shape[0]
    ci = jax.lax.broadcasted_iota(jnp.int32, (C, 1), 0)
    s = x_sq
    for k in (1, 2):
        up = pltpu.roll(x_sq, shift=-k, axis=0)     # up[i] = x_sq[i + k]
        dn = pltpu.roll(x_sq, shift=k, axis=0)      # dn[i] = x_sq[i - k]
        s = s + jnp.where(ci < C - k, up, 0.0) + jnp.where(ci >= k, dn, 0.0)
    _finish(xf, s, o_ref)


def _pick_tile(hw, C, itemsize, n_batches):
    """Fixed lane-dense spatial tile, budgeted for VMEM and megacore occupancy."""
    if hw < 128:
        return hw                                   # full extent (valid BlockSpec dim)
    budget = 10 << 20                               # ~10 MiB: fits v5e 16 MiB scoped default
    # 2x double-buffered in+out blocks at input dtype + ~4 f32 compute temporaries.
    per_col = C * (4 * itemsize + 4 * 4)
    t_max = max(128, (budget // per_col) // 128 * 128)
    T = min(1024, t_max, (hw // 128) * 128)
    # v7x has 2 TensorCores: force >= 2 grid points when possible (also enables pipelining).
    if n_batches * ((hw + T - 1) // T) < 2:
        half = (((hw + 1) // 2) + 127) // 128 * 128
        T = max(128, min(T, half))
    return T


def lrn(x):
    N, C, H, W = x.shape
    hw = H * W
    T = _pick_tile(hw, C, x.dtype.itemsize, N)
    xr = x.reshape(N, C, hw)                        # lane-dense layout
    grid = (N, pl.cdiv(hw, T))

    data_spec = pl.BlockSpec((1, C, T), lambda n, t: (n, 0, t))
    use_mxu = C <= 256
    if use_mxu:
        ci = jnp.arange(C)[:, None]
        cj = jnp.arange(C)[None, :]
        band = (jnp.abs(ci - cj) <= 2).astype(jnp.float32)
        kernel = lrn_band_kernel
        in_specs = [pl.BlockSpec((C, C), lambda n, t: (0, 0)), data_spec]
        args = (band, xr)
        flops = (2 * C * C + 8 * C) * hw * N        # banded matmul + elementwise
    else:
        kernel = lrn_roll_kernel
        in_specs = [data_spec]
        args = (xr,)
        flops = 16 * C * hw * N

    out = pl.pallas_call(
        kernel,
        out_shape=jax.ShapeDtypeStruct((N, C, hw), x.dtype),
        grid=grid,
        in_specs=in_specs,
        out_specs=data_spec,
        compiler_params=pltpu.CompilerParams(
            dimension_semantics=("parallel", "parallel")),
        cost_estimate=pl.CostEstimate(
            flops=flops,
            transcendentals=2 * N * C * hw,
            bytes_accessed=2 * N * C * hw * x.dtype.itemsize),
    )(*args)
    return out.reshape(N, C, H, W)


def lrn_reference(x):
    # Pure-JAX reference mirroring the PyTorch forward exactly.
    x_sq = x ** 2
    xp = jnp.pad(x_sq, ((0, 0), (2, 2), (0, 0), (0, 0)))
    C = x.shape[1]
    s = sum(xp[:, k:k + C] for k in range(5))
    return x / (2.0 + 0.0001 * s) ** 0.75


if __name__ == "__main__":
    key = jax.random.PRNGKey(0)
    x = jax.random.normal(key, (2, 4, 16, 16), dtype=jnp.float32)

    out = jax.block_until_ready(lrn(x))

    ref = lrn_reference(x)
    assert out.shape == x.shape and out.dtype == x.dtype
    assert jnp.allclose(out, ref, atol=1e-5, rtol=1e-5), "mismatch vs reference"

    print("KERNEL_OK")
</pallas_src>

<mosaic_0001>
module attributes {stable_mosaic.version = 11 : i64} {
  func.func @lrn_band_kernel(%arg0: i32, %arg1: i32, %arg2: memref<4x4xf32, #tpu.memory_space<vmem>>, %arg3: memref<1x4x256xf32, #tpu.memory_space<vmem>>, %arg4: memref<1x4x256xf32, #tpu.memory_space<vmem>>) attributes {dimension_semantics = [#tpu.dimension_semantics<parallel>, #tpu.dimension_semantics<parallel>], iteration_bounds = array<i64: 2, 1>, scalar_prefetch = 0 : i64, scratch_operands = 0 : i64, tpu.core_type = #tpu.core_type<tc>, window_params = [{pipeline_mode = #tpu.pipeline_mode<synchronous>, transform_indices = @transform_0, window_bounds = array<i64: 4, 4>}, {transform_indices = @transform_1, window_bounds = array<i64: 1, 4, 256>}, {transform_indices = @transform_2, window_bounds = array<i64: 1, 4, 256>}]} {
    %c0 = arith.constant 0 : index
    %c0_0 = arith.constant 0 : index
    %c0_1 = arith.constant 0 : index
    %0 = vector.load %arg3[%c0, %c0_0, %c0_1] : memref<1x4x256xf32, #tpu.memory_space<vmem>>, vector<1x4x256xf32>
    %1 = vector.shape_cast %0 : vector<1x4x256xf32> to vector<4x256xf32>
    %2 = arith.mulf %1, %1 : vector<4x256xf32>
    %c0_2 = arith.constant 0 : index
    %c0_3 = arith.constant 0 : index
    %3 = vector.load %arg2[%c0_2, %c0_3] : memref<4x4xf32, #tpu.memory_space<vmem>>, vector<4x4xf32>
    %cst = arith.constant dense<0.000000e+00> : vector<4x256xf32>
    %4 = tpu.matmul %3, %2, %cst {dimension_numbers = #tpu.dot_dimension_numbers<[1], [0], [0], [1], [0, 0, 1, 1], [], []>} : vector<4x4xf32>, vector<4x256xf32>, vector<4x256xf32> -> vector<4x256xf32>
    %cst_4 = arith.constant 9.99999974E-5 : f32
    %5 = vector.broadcast %cst_4 : f32 to vector<4x256xf32>
    %6 = arith.mulf %5, %4 : vector<4x256xf32>
    %cst_5 = arith.constant 2.000000e+00 : f32
    %7 = vector.broadcast %cst_5 : f32 to vector<4x256xf32>
    %8 = arith.addf %7, %6 : vector<4x256xf32>
    %9 = math.sqrt %8 : vector<4x256xf32>
    %10 = arith.mulf %8, %9 : vector<4x256xf32>
    %11 = math.rsqrt %10 : vector<4x256xf32>
    %12 = arith.mulf %1, %11 : vector<4x256xf32>
    %c0_6 = arith.constant 0 : index
    %c0_7 = arith.constant 0 : index
    %c0_8 = arith.constant 0 : index
    %13 = vector.load %arg4[%c0_6, %c0_7, %c0_8] : memref<1x4x256xf32, #tpu.memory_space<vmem>>, vector<1x4x256xf32>
    %14 = vector.shape_cast %13 : vector<1x4x256xf32> to vector<4x256xf32>
    %15 = vector.shape_cast %12 : vector<4x256xf32> to vector<1x4x256xf32>
    tpu.vector_store %arg4[%c0_6, %c0_7, %c0_8], %15 {strides = array<i32>} : memref<1x4x256xf32, #tpu.memory_space<vmem>>, vector<1x4x256xf32>,
    return
  }
  func.func @transform_0(%arg0: i32, %arg1: i32) -> (i32, i32) {
    %c0_i32 = arith.constant 0 : i32
    %c0_i32_0 = arith.constant 0 : i32
    %c0_i32_1 = arith.constant 0 : i32
    return %c0_i32, %c0_i32_0 : i32, i32
  }
  func.func @transform_1(%arg0: i32, %arg1: i32) -> (i32, i32, i32) {
    %c0_i32 = arith.constant 0 : i32
    %c0_i32_0 = arith.constant 0 : i32
    return %arg0, %c0_i32, %arg1 : i32, i32, i32
  }
  func.func @transform_2(%arg0: i32, %arg1: i32) -> (i32, i32, i32) {
    %c0_i32 = arith.constant 0 : i32
    %c0_i32_0 = arith.constant 0 : i32
    return %arg0, %c0_i32, %arg1 : i32, i32, i32
  }
}

</mosaic_0001>

<llo_original>
// kernel: tpu_custom_call.1
$region0: #{tpu_custom_call.1}
  #allocation0 [shape = 'u32[]', space=smem, size = 0x4, offset = 0x4, fixed_abs, tag = 'smem constant byte address 0x4 - core index']
  #allocation1 [shape = 'u32[144,128]{1,0:T(1,128)}', space=vmem, size = 0x12000, scoped, tag = 'internal scratch']
  %s0 = inlined_call_operand.hbm [shape: f32[4,4], index: 0, kind: input, shape index: {}]
  %s1 = inlined_call_operand.hbm [shape: f32[2,4,256], index: 1, kind: input, shape index: {}]
  %s2 = inlined_call_operand.hbm [shape: f32[2,4,256], index: 2, kind: output, shape index: {}]
  %s3 = sld [smem:[#allocation0]]
  $region49: #{tpu_custom_call.1} parent=0
    _
  %s5 = ssub.s32 1, %s3
  %s6 = scalar_select 0, %s5, %s3
  $region1: #{tpu_custom_call.1} parent=0
    #allocation2 [shape = 'u8[2048]{0}', space=vmem, size = 0x800, scoped, tag = 'input window, operand 0, single buffered']
    #allocation3 [shape = 's32[2]{0}', space=sflag, size = 0x8, scoped, tag = 'scoped memory for tpu_custom_call.1']
    #allocation4 [shape = 's32[2]{0}', space=sflag, size = 0x8, scoped, tag = 'scoped memory for tpu_custom_call.1']
    #allocation5 [shape = 'u8[8192]{0}', space=vmem, size = 0x2000, scoped, tag = 'input window, operand 1']
    #allocation6 [shape = 's32[2]{0}', space=sflag, size = 0x8, scoped, tag = 'scoped memory for tpu_custom_call.1']
    #allocation7 [shape = 'u8[8192]{0}', space=vmem, size = 0x2000, scoped, tag = 'output window, operand 0']
    %7 = vsyncpa [#allocation3], 0
    %8 = vsyncpa [#allocation6], 0
    %s9 = scalar_lea.sflag [#allocation6], 1
    %10 = vsyncpa %s9, 0
    %11 = vsyncpa [#allocation4], 0
    %s12 = scalar_lea.sflag [#allocation4], 1
    %13 = vsyncpa %s12, 0
    loop: start=0, step=1, limit=4
    $region2: #{tpu_custom_call.1} parent=1 // loop_pre_header
      _
    $region3: #{tpu_custom_call.1} parent=1 // loop_header
      %s15 = sphi 0, %s19
      %p16 = scmp.ge.s32.totalorder %s15, 4
      %s22 = sphi 0, %s34
      %s23 = sphi 0, %s30
      %s24 = sphi 0, %s22
      %s25 = sphi 0, %s23
      %s26 = sphi 0, %s24
      %s27 = sphi 0, %s25
      %s35 = sphi 0, %s35
      %s37 = sphi 0, %s35
      %s38 = sphi 0, %s37
      %s52 = sphi 0, %s38
      %s60 = sphi 0, %s62
      %s63 = sphi 0, %s60
      %s64 = sphi 0, %s63
      %s80 = sphi 0, %s64
      %s88 = sphi 0, %s90
      %s91 = sphi 0, %s88
      %s92 = sphi 0, %s91
      %s108 = sphi 0, %s92
    $region4: #{tpu_custom_call.1} parent=1 // loop_header_branch
      %18 = sbr.rel (%p16) target = $region8
    $region5: #{tpu_custom_call.1} parent=1 // loop_body
      %s20 = ssub.s32 %s15, 1
      %s21 = ssub.s32 %s15, 2
      %s28 = sadd.s32 1, %s23
      %p29 = scmp.ge.s32.totalorder %s28, 1
      %s30 = scalar_select %p29, 0, %s28
      %s31 = sadd.s32 1, %s22
      %s32 = scalar_select %p29, %s31, %s22
      %p33 = scmp.ge.s32.totalorder %s32, 2
      %s34 = scalar_select %p33, 0, %s32
      %s36 = sadd.s32 %s35, 1
      %p39 = scmp.eq.s32.totalorder %s15, 1
      %p40 = scmp.ne.s32.totalorder %s35, %s37
      %p41 = scmp.eq.s32.totalorder %s15, 0
      %p42 = por %p40, %p41
      %p43 = scmp.ne.s32.totalorder %s35, %s37
      %p44 = scmp.eq.s32.totalorder %s20, 1
      %p45 = por %p43, %p44
      %p46 = scmp.ne.s32.totalorder %s37, %s38
      %p47 = scmp.eq.s32.totalorder %s20, 0
      %p48 = por %p46, %p47
      %p49 = scmp.ne.s32.totalorder %s37, %s38
      %p50 = scmp.eq.s32.totalorder %s21, 1
      %p51 = por %p49, %p50
      %p53 = scmp.ne.s32.totalorder %s38, %s52
      %p54 = scmp.eq.s32.totalorder %s21, 0
      %p55 = por %p53, %p54
      %s56 = ssub.s32 %s22, %s34
      %s57 = ssub.s32 %s23, %s30
      %s58 = sor.u32 %s56, %s57
      %p59 = scmp.eq.s32.totalorder %s58, 0
      %s61 = sadd.s32 %s60, 1
      %s62 = scalar_select %p59, %s60, %s61
      %p65 = pneg %p59
      %p66 = scmp.eq.s32.totalorder %s15, 1
      %p67 = por %p65, %p66
      %p68 = scmp.ne.s32.totalorder %s60, %s63
      %p69 = scmp.eq.s32.totalorder %s15, 0
      %p70 = por %p68, %p69
      %p71 = scmp.ne.s32.totalorder %s60, %s63
      %p72 = scmp.eq.s32.totalorder %s20, 1
      %p73 = por %p71, %p72
      %p74 = scmp.ne.s32.totalorder %s63, %s64
      %p75 = scmp.eq.s32.totalorder %s20, 0
      %p76 = por %p74, %p75
      %p77 = scmp.ne.s32.totalorder %s63, %s64
      %p78 = scmp.eq.s32.totalorder %s21, 1
      %p79 = por %p77, %p78
      %p81 = scmp.ne.s32.totalorder %s64, %s80
      %p82 = scmp.eq.s32.totalorder %s21, 0
      %p83 = por %p81, %p82
      %s84 = ssub.s32 %s22, %s34
      %s85 = ssub.s32 %s23, %s30
      %s86 = sor.u32 %s84, %s85
      %p87 = scmp.eq.s32.totalorder %s86, 0
      %s89 = sadd.s32 %s88, 1
      %s90 = scalar_select %p87, %s88, %s89
      %p93 = pneg %p87
      %p94 = scmp.eq.s32.totalorder %s15, 1
      %p95 = por %p93, %p94
      %p96 = scmp.ne.s32.totalorder %s88, %s91
      %p97 = scmp.eq.s32.totalorder %s15, 0
      %p98 = por %p96, %p97
      %p99 = scmp.ne.s32.totalorder %s88, %s91
      %p100 = scmp.eq.s32.totalorder %s20, 1
      %p101 = por %p99, %p100
      %p102 = scmp.ne.s32.totalorder %s91, %s92
      %p103 = scmp.eq.s32.totalorder %s20, 0
      %p104 = por %p102, %p103
      %p105 = scmp.ne.s32.totalorder %s91, %s92
      %p106 = scmp.eq.s32.totalorder %s21, 1
      %p107 = por %p105, %p106
      %p109 = scmp.ne.s32.totalorder %s92, %s108
      %p110 = scmp.eq.s32.totalorder %s21, 0
      %p111 = por %p109, %p110
      %p112 = scmp.le.s32.totalorder 1, %s15
      %p113 = scmp.lt.s32.totalorder %s15, 3
      %p114 = pnand %p112, %p113
      %p115 = pneg %p114
      // Predicated region
      $region9: #{tpu_custom_call.1} parent=5 // pred_check
        _
      $region10: #{tpu_custom_call.1} parent=5 // pred_check_branch
        %117 = sbr.rel (%p114) target = $region12
      $region11: #{tpu_custom_call.1} parent=5 // pred_region
        %s118 = ssub.s32 %s15, 1
        // Predicated region
        $region13: #{tpu_custom_call.1} parent=11 // pred_check
          %p119 = pneg %p48
        $region14: #{tpu_custom_call.1} parent=11 // pred_check_branch
          %121 = sbr.rel (%p119) target = $region16
        $region15: #{tpu_custom_call.1} parent=11 // pred_region
          %s123 = ssub.s32 64, 64
          %124 = vsyncadd [#allocation3], %s123
          %s126 = sshll.u32 [#allocation2], 4
          %s127 = int_to_ptr.vmem [resolvable:$true] %s126
          %129 = dma.hbm_to_vmem [thread:$0]  %s0, 64, %s127, [#allocation3]
        $region16: #{tpu_custom_call.1} parent=11 // pred_fallthru
          _
      $region12: #{tpu_custom_call.1} parent=5 // pred_fallthru
        _
      %p130 = scmp.lt.s32.totalorder %s15, 2
      // Predicated region
      $region17: #{tpu_custom_call.1} parent=5 // pred_check
        %p131 = pneg %p130
      $region18: #{tpu_custom_call.1} parent=5 // pred_check_branch
        %133 = sbr.rel (%p131) target = $region20
      $region19: #{tpu_custom_call.1} parent=5 // pred_region
        // Predicated region
        $region21: #{tpu_custom_call.1} parent=19 // pred_check
          %p134 = pneg %p70
        $region22: #{tpu_custom_call.1} parent=19 // pred_check_branch
          %136 = sbr.rel (%p134) target = $region24
        $region23: #{tpu_custom_call.1} parent=19 // pred_region
          %s137 = sand.u32 %s60, 1
          %s138 = scalar_lea.sflag [#allocation6], %s137
          %s139 = sand.u32 %s60, 1
          %s140 = smul.addr %s139, 8
          %s141 = scalar_lea.vmem [#allocation5], %s140
          %s142 = smul.u32 2, %s23
          %s144 = ssub.s32 128, 128
          %145 = vsyncadd %s138, %s144
          %s146 = smul.addr %s22, 2
          %s147 = sadd.s32 %s142, %s146
          %s148 = smul.addr %s147, 64
          %s149 = scalar_lea.hbm %s1, %s148
          %s151 = sshll.u32 %s141, 4
          %s152 = int_to_ptr.vmem [resolvable:$true] %s151
          %154 = dma.hbm_to_vmem [thread:$0]  %s149, 128, %s152, %s138
        $region24: #{tpu_custom_call.1} parent=19 // pred_fallthru
          _
      $region20: #{tpu_custom_call.1} parent=5 // pred_fallthru
        _
      %p155 = scmp.le.s32.totalorder 1, %s15
      %p156 = scmp.lt.s32.totalorder %s15, 3
      %p157 = pnand %p155, %p156
      %p158 = pneg %p157
      // Predicated region
      $region25: #{tpu_custom_call.1} parent=5 // pred_check
        _
      $region26: #{tpu_custom_call.1} parent=5 // pred_check_branch
        %160 = sbr.rel (%p157) target = $region28
      $region27: #{tpu_custom_call.1} parent=5 // pred_region
        %s161 = ssub.s32 %s15, 1
        // Predicated region
        $region29: #{tpu_custom_call.1} parent=27 // pred_check
          %p162 = pneg %p48
        $region30: #{tpu_custom_call.1} parent=27 // pred_check_branch
          %164 = sbr.rel (%p162) target = $region32
        $region31: #{tpu_custom_call.1} parent=27 // pred_region
          %165 = dma.done [#allocation3], 64
        $region32: #{tpu_custom_call.1} parent=27 // pred_fallthru
          _
        %s166 = sand.u32 %s63, 1
        %s167 = scalar_lea.sflag [#allocation6], %s166
        %s168 = sand.u32 %s63, 1
        %s169 = smul.addr %s168, 8
        %s170 = scalar_lea.vmem [#allocation5], %s169
        // Predicated region
        $region33: #{tpu_custom_call.1} parent=27 // pred_check
          %p171 = pneg %p76
        $region34: #{tpu_custom_call.1} parent=27 // pred_check_branch
          %173 = sbr.rel (%p171) target = $region36
        $region35: #{tpu_custom_call.1} parent=27 // pred_region
          %174 = dma.done %s167, 128
        $region36: #{tpu_custom_call.1} parent=27 // pred_fallthru
          _
        %p175 = pneg %p48
        %p176 = pneg %p45
        %s177 = sand.u32 %s63, 1
        %s178 = scalar_lea.sflag [#allocation6], %s177
        %s179 = sand.u32 %s63, 1
        %s180 = smul.addr %s179, 8
        %s181 = scalar_lea.vmem [#allocation5], %s180
        %p182 = pneg %p76
        %p183 = pneg %p73
        %p184 = pneg %p104
        %p185 = pneg %p101
        %s186 = sand.u32 %s91, 1
        %s187 = scalar_lea.sflag [#allocation4], %s186
        %s188 = sand.u32 %s91, 1
        %s189 = smul.addr %s188, 8
        %s190 = scalar_lea.vmem [#allocation7], %s189
        %s191 = smul.u32 2, %s25
        %s192 = smul.u32 2, %s25
        %v193 = vld [vmem:[%s170] sm:$0xff]
        %v194 = vmul.f32 %v193, %v193
        %v195 = vld [vmem:[#allocation2] sm:$0xf]
        %v197 = vcombine.high %v194, %v194
        %vm198 = vcmask 31744
        %v200 = vsel %vm198, %v195, 0
        %vm202 = vcmask 1043456
        %v203 = vsel %vm202, %v194, 0
        %v205 = vsel %vm202, %v197, 0
        %207 = vmatprep.subr.mxu0 0.0
        %208 = vmatpush1.msra.mxu0 0.0
        %209 = vmatprep.subr.mxu0 0.0
        %210 = vmatpush1.msra.mxu0 0.0
        %211 = vmatprep.subr.mxu0 0.0
        %212 = vmatpush1.msra.mxu0 0.0
        %213 = vmatprep.subr.mxu0 0.0
        %214 = vmatpush1.msra.mxu0 0.0
        %215 = vmatprep.subr.mxu0 0.0
        %216 = vmatpush1.msra.mxu0 0.0
        %217 = vmatprep.subr.mxu0 0.0
        %218 = vmatpush1.msra.mxu0 0.0
        %219 = vmatprep.subr.mxu0 0.0
        %220 = vmatpush1.msra.mxu0 0.0
        %221 = vmatprep.subr.mxu0 0.0
        %222 = vmatpush1.msra.mxu0 0.0
        %223 = vmatprep.subr.mxu0 0.0
        %224 = vmatpush1.msra.mxu0 0.0
        %225 = vmatprep.subr.mxu0 0.0
        %226 = vmatpush1.msra.mxu0 0.0
        %227 = vmatprep.subr.mxu0 0.0
        %228 = vmatpush1.msra.mxu0 0.0
        %229 = vmatprep.subr.mxu0 0.0
        %230 = vmatpush1.msra.mxu0 0.0
        %231 = vmatprep.subr.mxu0 0.0
        %232 = vmatpush1.msra.mxu0 0.0
        %233 = vmatprep.subr.mxu0 0.0
        %234 = vmatpush1.msra.mxu0 0.0
        %235 = vmatprep.subr.mxu0 0.0
        %236 = vmatpush1.msra.mxu0 0.0
        %237 = vmatprep.subr.mxu0 %v205
        %238 = vmatpush1.msra.mxu0 %v203
        %239 = vmatprep.subr.mxu0 0.0
        %240 = vmatpush2.msra.mxu0 0.0
        %241 = vmatprep.subr.mxu0 0.0
        %242 = vmatpush2.msra.mxu0 0.0
        %243 = vmatprep.subr.mxu0 0.0
        %244 = vmatpush2.msra.mxu0 0.0
        %245 = vmatprep.subr.mxu0 0.0
        %246 = vmatpush2.msra.mxu0 0.0
        %247 = vmatprep.subr.mxu0 0.0
        %248 = vmatpush2.msra.mxu0 0.0
        %249 = vmatprep.subr.mxu0 0.0
        %250 = vmatpush2.msra.mxu0 0.0
        %251 = vmatprep.subr.mxu0 0.0
        %252 = vmatpush2.msra.mxu0 0.0
        %253 = vmatprep.subr.mxu0 0.0
        %254 = vmatpush2.msra.mxu0 0.0
        %255 = vmatprep.subr.mxu0 0.0
        %256 = vmatpush2.msra.mxu0 0.0
        %257 = vmatprep.subr.mxu0 0.0
        %258 = vmatpush2.msra.mxu0 0.0
        %259 = vmatprep.subr.mxu0 0.0
        %260 = vmatpush2.msra.mxu0 0.0
        %261 = vmatprep.subr.mxu0 0.0
        %262 = vmatpush2.msra.mxu0 0.0
        %263 = vmatprep.subr.mxu0 0.0
        %264 = vmatpush2.msra.mxu0 0.0
        %265 = vmatprep.subr.mxu0 0.0
        %266 = vmatpush2.msra.mxu0 0.0
        %267 = vmatprep.subr.mxu0 0.0
        %268 = vmatpush2.msra.mxu0 0.0
        %269 = vmatprep.subr.mxu0 0.0
        %270 = vmatpush2.msra.mxu0 0.0
        %271 = vmatprep.mubr.f32.mxu0 0.0
        %272 = vmatmul.mubr.f32.gmra.mxu0 %v200
        %v273 = vpop.f32.mrf.mxu0
        %v274 = vadd.f32 0.0, %v273
        %v275 = vpop.f32.mrf.mxu0
        %v276 = vadd.f32 0.0, %v275
        %277 = vdwg.mxu0
        %v278 = vmul.f32 %v274, 0.0001
        %v279 = vmul.f32 %v276, 0.0001
        %v280 = vadd.f32 %v278, 2.0
        %v281 = vadd.f32 %v279, 2.0
        %v282 = vrsqrt.pop %v280
        %v283 = vmul.f32 %v280, %v282
        %vm284 = vcmp.eq.f32.partialorder %v280, inf
        %v285 = vsel %vm284, %v280, %v283
        %vm286 = vcmp.eq.f32.partialorder %v280, 0.0
        %v287 = vand.u32 %v280, 2147483648
        %v288 = vsel %vm286, %v287, %v285
        %v289 = vrsqrt.pop %v281
        %v290 = vmul.f32 %v281, %v289
        %vm291 = vcmp.eq.f32.partialorder %v281, inf
        %v292 = vsel %vm291, %v281, %v290
        %vm293 = vcmp.eq.f32.partialorder %v281, 0.0
        %v294 = vand.u32 %v281, 2147483648
        %v295 = vsel %vm293, %v294, %v292
        %v296 = vmul.f32 %v280, %v288
        %v297 = vmul.f32 %v281, %v295
        %v298 = vrsqrt.pop %v296
        %v299 = vrsqrt.pop %v297
        %v302 = vcombine.low %v298, %v299
        %v304 = vmul.f32 %v193, %v302
        %305 = vst [vmem:[%s190] sm:$0xff] %v304
        %s306 = sand.u32 %s91, 1
        %s307 = scalar_lea.sflag [#allocation4], %s306
        %s308 = sand.u32 %s91, 1
        %s309 = smul.addr %s308, 8
        %s310 = scalar_lea.vmem [#allocation7], %s309
        // Predicated region
        $region37: #{tpu_custom_call.1} parent=27 // pred_check
          %p311 = pneg %p101
        $region38: #{tpu_custom_call.1} parent=27 // pred_check_branch
          %313 = sbr.rel (%p311) target = $region40
        $region39: #{tpu_custom_call.1} parent=27 // pred_region
          %s314 = smul.u32 2, %s25
          %s316 = ssub.s32 128, 128
          %317 = vsyncadd %s307, %s316
          %s318 = smul.addr %s24, 2
          %s319 = sadd.s32 %s314, %s318
          %s320 = smul.addr %s319, 64
          %s321 = scalar_lea.hbm %s2, %s320
          %s323 = sshll.u32 %s310, 4
          %s324 = int_to_ptr.vmem [resolvable:$true] %s323
          %326 = dma.vmem_to_hbm [thread:$0]  %s324, 128, %s321, %s307
        $region40: #{tpu_custom_call.1} parent=27 // pred_fallthru
          _
      $region28: #{tpu_custom_call.1} parent=5 // pred_fallthru
        _
      %p327 = scmp.le.s32.totalorder 2, %s15
      // Predicated region
      $region41: #{tpu_custom_call.1} parent=5 // pred_check
        %p328 = pneg %p327
      $region42: #{tpu_custom_call.1} parent=5 // pred_check_branch
        %330 = sbr.rel (%p328) target = $region44
      $region43: #{tpu_custom_call.1} parent=5 // pred_region
        %s331 = ssub.s32 %s15, 2
        // Predicated region
        $region45: #{tpu_custom_call.1} parent=43 // pred_check
          %p332 = pneg %p107
        $region46: #{tpu_custom_call.1} parent=43 // pred_check_branch
          %334 = sbr.rel (%p332) target = $region48
        $region47: #{tpu_custom_call.1} parent=43 // pred_region
          %s335 = sand.u32 %s92, 1
          %s336 = scalar_lea.sflag [#allocation4], %s335
          %s337 = sand.u32 %s92, 1
          %s338 = smul.addr %s337, 8
          %s339 = scalar_lea.vmem [#allocation7], %s338
          %340 = dma.done %s336, 128
        $region48: #{tpu_custom_call.1} parent=43 // pred_fallthru
          _
      $region44: #{tpu_custom_call.1} parent=5 // pred_fallthru
        _
    $region6: #{tpu_custom_call.1} parent=1 // loop_footer
      %s19 = sadd.s32 1, %s15
    $region7: #{tpu_custom_call.1} parent=1 // loop_footer_branch
      %14 = sbr.rel target = $region3
    $region8: #{tpu_custom_call.1} parent=1 // loop_exit
      _
    %341 = vsyncpa [#allocation3], 1
    %s342 = scalar_lea.sflag [#allocation3], 1
    %343 = vsyncpa %s342, 1
    %344 = vsyncpa [#allocation6], 1
    %s345 = scalar_lea.sflag [#allocation6], 1
    %346 = vsyncpa %s345, 1
    %347 = vsyncpa [#allocation4], 1
    %s348 = scalar_lea.sflag [#allocation4], 1
    %349 = vsyncpa %s348, 1

</llo_original>
